<compile_context>
chip_gen: v6e
topology: v6e:2x2x1
jax: 0.10.0
libtpu: 0.0.40
codegen_flags: <defaults>
</compile_context>

<pallas_src>
import jax
import jax.numpy as jnp
from jax.experimental import pallas as pl
from jax.experimental.pallas import tpu as pltpu


def _sublane_tile(dtype):
    """Sublane tile (rows) for a given MXU operand dtype: 8 for f32, 16 for bf16."""
    return 32 // jnp.dtype(dtype).itemsize


def multi_in_kernel(x1_ref, x2_ref, x3_ref, w_main_ref, w_out_ref, b_ref, q_ref):
    """Fused Multi_in forward for one state block.

    x{1,2,3}_ref: (B, obs)                 f32
    w_main_ref:   (obs_pad + 5*H, H)       cdt   rows = [w_up1(pad); w_dn1; w_up2; w_dn2]
    w_out_ref:    (H, A+1)                 cdt
    b_ref:        (8, max(H, A+1))         f32   rows = [b_up1, b_up2, b_dn1, b_dn2, b_out, 0, 0, 0]
    q_ref:        (1, A+1)                 f32
    """
    B, obs = x1_ref.shape
    H = w_out_ref.shape[0]
    out_dim = q_ref.shape[1]
    cdt = w_main_ref.dtype                       # MXU operand dtype (bf16 default, or f32)
    tile = _sublane_tile(cdt)
    obs_pad = ((obs + tile - 1) // tile) * tile  # matches pack_params padding

    # Static, tile-aligned slices of the packed weight block.
    w_up1 = w_main_ref[0:obs, :]
    w_dn1_a = w_main_ref[obs_pad + 0 * H:obs_pad + 1 * H, :]
    w_dn1_b = w_main_ref[obs_pad + 1 * H:obs_pad + 2 * H, :]
    w_dn1_c = w_main_ref[obs_pad + 2 * H:obs_pad + 3 * H, :]
    w_up2 = w_main_ref[obs_pad + 3 * H:obs_pad + 4 * H, :]
    w_dn2 = w_main_ref[obs_pad + 4 * H:obs_pad + 5 * H, :]

    b = b_ref[...]
    b_up1 = b[0:1, 0:H]
    b_up2 = b[1:2, 0:H]
    b_dn1 = b[2:3, 0:H]
    b_dn2 = b[3:4, 0:H]
    b_out = b[4:5, 0:out_dim]

    def dense(a, w, bias):
        acc = jnp.dot(a.astype(cdt), w, preferred_element_type=jnp.float32)
        return jnp.maximum(acc + bias, 0.0)

    # Fused up-branches: stack x1/x2/x3 along sublanes (near-free vreg placement),
    # then one (3B, obs) @ (obs, H) and one (3B, H) @ (H, H).
    x_all = jnp.concatenate([x1_ref[...], x2_ref[...], x3_ref[...]], axis=0)   # (3B, obs)
    h = dense(x_all, w_up1, b_up1)
    h = dense(h, w_up2, b_up2)                                                 # (3B, H), f32

    # down_layer1 as three K=H dots accumulated into one f32 accumulator
    # (equivalent to concat([h1,h2,h3],-1) @ w_dn1 but without the lane relayout).
    h1 = h[0:B]
    h2 = h[B:2 * B]
    h3 = h[2 * B:3 * B]
    acc = jnp.dot(h1.astype(cdt), w_dn1_a, preferred_element_type=jnp.float32)
    acc = acc + jnp.dot(h2.astype(cdt), w_dn1_b, preferred_element_type=jnp.float32)
    acc = acc + jnp.dot(h3.astype(cdt), w_dn1_c, preferred_element_type=jnp.float32)
    d = jnp.maximum(acc + b_dn1, 0.0)                                          # (B, H)

    d = dense(d, w_dn2, b_dn2)                                                 # (B, H)
    y = dense(d, w_out_ref[...], b_out)                                        # (B, A+1)

    # Q = y[0] + mean(y[1:]): single masked sum (no difference-of-sums cancellation).
    inv = 1.0 / float((B - 1) * out_dim)
    row_ids = jax.lax.broadcasted_iota(jnp.int32, y.shape, 0)
    tail_sum = jnp.sum(jnp.where(row_ids > 0, y, 0.0))
    q_ref[...] = y[0:1, :] + tail_sum * inv


def pack_params(params, *, mxu_dtype=jnp.bfloat16):
    """Pack the 10 (in, out)-layout linear params into 3 kernel arrays.

    bf16 MXU operands by default on all generations (f32 bias/accum/ReLU in-kernel);
    pass mxu_dtype=jnp.float32 for an exact path.
    """
    (w_up1, b_up1, w_up2, b_up2,
     w_dn1, b_dn1, w_dn2, b_dn2,
     w_out, b_out) = params
    obs = w_up1.shape[0]
    H = w_up2.shape[0]
    out_dim = w_out.shape[1]
    width = max(H, out_dim)

    tile = _sublane_tile(mxu_dtype)
    if H % tile != 0:
        raise ValueError(f"hidden size {H} must be a multiple of the sublane tile {tile} "
                         f"for dtype {jnp.dtype(mxu_dtype)} (packed-slice alignment).")
    obs_pad = ((obs + tile - 1) // tile) * tile

    w_up1_p = jnp.pad(jnp.asarray(w_up1, jnp.float32), ((0, obs_pad - obs), (0, 0)))
    w_main = jnp.concatenate(
        [w_up1_p, jnp.asarray(w_dn1, jnp.float32),
         jnp.asarray(w_up2, jnp.float32), jnp.asarray(w_dn2, jnp.float32)],
        axis=0).astype(mxu_dtype)                     # (obs_pad + 5H, H)

    def row(v):
        v = jnp.asarray(v, jnp.float32).reshape(1, -1)
        return jnp.pad(v, ((0, 0), (0, width - v.shape[1])))

    b_all = jnp.concatenate(
        [row(b_up1), row(b_up2), row(b_dn1), row(b_dn2), row(b_out),
         jnp.zeros((3, width), jnp.float32)], axis=0)  # (8, width), biases stay f32

    return w_main, jnp.asarray(w_out, jnp.float32).astype(mxu_dtype), b_all


def _multi_in_forward_states(x1, x2, x3, w_main, w_out, b_all):
    """Batched forward over S independent states: x* have shape (S, B, obs) -> (S, A+1)."""
    S, B, obs = x1.shape
    if B < 2:
        raise ValueError("Multi_in Q = x[0] + mean(x[1:]) requires batch >= 2.")
    out_dim = w_out.shape[1]

    x_spec = pl.BlockSpec((None, B, obs), lambda s: (s, 0, 0))
    const = lambda shp: pl.BlockSpec(shp, lambda s: (0, 0))   # weights stay VMEM-resident

    q = pl.pallas_call(
        multi_in_kernel,
        out_shape=jax.ShapeDtypeStruct((S, 1, out_dim), jnp.float32),
        grid=(S,),
        in_specs=[x_spec, x_spec, x_spec,
                  const(w_main.shape), const(w_out.shape), const(b_all.shape)],
        out_specs=pl.BlockSpec((None, 1, out_dim), lambda s: (s, 0, 0)),
        compiler_params=pltpu.CompilerParams(
            dimension_semantics=("parallel",)),   # shards state blocks across v7x's 2 TCs
    )(x1.astype(jnp.float32), x2.astype(jnp.float32), x3.astype(jnp.float32),
      w_main, w_out, b_all)
    return q.reshape(S, out_dim)


multi_in_forward_states = jax.jit(_multi_in_forward_states)


@jax.jit
def multi_in_forward(x1, x2, x3, w_main, w_out, b_all):
    """Single forward: x* have shape (B, obs) -> (A+1,), matching torch semantics."""
    q = _multi_in_forward_states(x1[None], x2[None], x3[None], w_main, w_out, b_all)
    return q[0]


def init_params(key, observation_size, action_size, hidden=64):
    """Deterministic synthetic init; weights stored as (in, out)."""
    ks = jax.random.split(key, 10)

    def lin(kw, kb, fan_in, fan_out):
        bound = 1.0 / jnp.sqrt(fan_in)
        w = jax.random.uniform(kw, (fan_in, fan_out), jnp.float32, -bound, bound)
        b = jax.random.uniform(kb, (1, fan_out), jnp.float32, -bound, bound)
        return w, b

    w_up1, b_up1 = lin(ks[0], ks[1], observation_size, hidden)
    w_up2, b_up2 = lin(ks[2], ks[3], hidden, hidden)
    w_dn1, b_dn1 = lin(ks[4], ks[5], hidden * 3, hidden)
    w_dn2, b_dn2 = lin(ks[6], ks[7], hidden, hidden)
    w_out, b_out = lin(ks[8], ks[9], hidden, action_size + 1)
    return (w_up1, b_up1, w_up2, b_up2,
            w_dn1, b_dn1, w_dn2, b_dn2,
            w_out, b_out)


def reference_forward(x1, x2, x3, params):
    (w_up1, b_up1, w_up2, b_up2,
     w_dn1, b_dn1, w_dn2, b_dn2,
     w_out, b_out) = params

    def up(x):
        h = jnp.maximum(x @ w_up1 + b_up1, 0.0)
        return jnp.maximum(h @ w_up2 + b_up2, 0.0)

    h = jnp.concatenate([up(x1), up(x2), up(x3)], axis=-1)
    h = jnp.maximum(h @ w_dn1 + b_dn1, 0.0)
    h = jnp.maximum(h @ w_dn2 + b_dn2, 0.0)
    x = jnp.maximum(h @ w_out + b_out, 0.0)
    return x[0] + jnp.mean(x[1:])


if __name__ == "__main__":
    observation_size = 32
    action_size = 4
    hidden = 64
    batch = 8          # multiple of 8 -> in-kernel sublane stack/slices are tile-aligned
    n_states = 4       # independent forward passes served by one gridded pallas_call

    key = jax.random.PRNGKey(0)
    kx1, kx2, kx3, kp, kb1, kb2, kb3 = jax.random.split(key, 7)

    x1 = jax.random.normal(kx1, (batch, observation_size), jnp.float32)
    x2 = jax.random.normal(kx2, (batch, observation_size), jnp.float32)
    x3 = jax.random.normal(kx3, (batch, observation_size), jnp.float32)

    params = init_params(kp, observation_size, action_size, hidden)
    q_ref = reference_forward(x1, x2, x3, params)

    # Exact path: f32 MXU operands (for accuracy verification).
    w_main32, w_out32, b_all32 = pack_params(params, mxu_dtype=jnp.float32)
    q32 = jax.block_until_ready(multi_in_forward(x1, x2, x3, w_main32, w_out32, b_all32))
    assert q32.shape == (action_size + 1,)
    assert jnp.allclose(q32, q_ref, atol=1e-4, rtol=1e-4)

    # Default fast path (all generations): bf16 MXU operands, f32 bias/accum/ReLU.
    w_main_bf, w_out_bf, b_all_bf = pack_params(params)     # mxu_dtype=jnp.bfloat16
    qbf = jax.block_until_ready(multi_in_forward(x1, x2, x3, w_main_bf, w_out_bf, b_all_bf))
    assert qbf.shape == (action_size + 1,)
    assert jnp.allclose(qbf, q_ref, atol=1e-1, rtol=1e-1)

    # Multi-state serving path: S independent forwards in one gridded call (parallel grid).
    x1s = jax.random.normal(kb1, (n_states, batch, observation_size), jnp.float32)
    x2s = jax.random.normal(kb2, (n_states, batch, observation_size), jnp.float32)
    x3s = jax.random.normal(kb3, (n_states, batch, observation_size), jnp.float32)
    qs = jax.block_until_ready(
        multi_in_forward_states(x1s, x2s, x3s, w_main32, w_out32, b_all32))
    q_refs = jnp.stack([reference_forward(x1s[i], x2s[i], x3s[i], params)
                        for i in range(n_states)])
    assert qs.shape == (n_states, action_size + 1)
    assert jnp.allclose(qs, q_refs, atol=1e-4, rtol=1e-4)

    print("KERNEL_OK")
</pallas_src>

<mosaic_0001>
module attributes {stable_mosaic.version = 11 : i64} {
  func.func @multi_in_kernel(%arg0: i32, %arg1: memref<1x8x32xf32, #tpu.memory_space<vmem>>, %arg2: memref<1x8x32xf32, #tpu.memory_space<vmem>>, %arg3: memref<1x8x32xf32, #tpu.memory_space<vmem>>, %arg4: memref<352x64xf32, #tpu.memory_space<vmem>>, %arg5: memref<64x5xf32, #tpu.memory_space<vmem>>, %arg6: memref<8x64xf32, #tpu.memory_space<vmem>>, %arg7: memref<1x1x5xf32, #tpu.memory_space<vmem>>) attributes {dimension_semantics = [#tpu.dimension_semantics<parallel>], iteration_bounds = array<i64: 1>, scalar_prefetch = 0 : i64, scratch_operands = 0 : i64, tpu.core_type = #tpu.core_type<tc>, window_params = [{transform_indices = @transform_0, window_bounds = array<i64: 1, 8, 32>}, {transform_indices = @transform_1, window_bounds = array<i64: 1, 8, 32>}, {transform_indices = @transform_2, window_bounds = array<i64: 1, 8, 32>}, {pipeline_mode = #tpu.pipeline_mode<synchronous>, transform_indices = @transform_3, window_bounds = array<i64: 352, 64>}, {pipeline_mode = #tpu.pipeline_mode<synchronous>, transform_indices = @transform_4, window_bounds = array<i64: 64, 5>}, {pipeline_mode = #tpu.pipeline_mode<synchronous>, transform_indices = @transform_5, window_bounds = array<i64: 8, 64>}, {transform_indices = @transform_6, window_bounds = array<i64: 1, 1, 5>}]} {
    %c0 = arith.constant 0 : index
    %c0_0 = arith.constant 0 : index
    %0 = vector.load %arg4[%c0, %c0_0] : memref<352x64xf32, #tpu.memory_space<vmem>>, vector<32x64xf32>
    %c32 = arith.constant 32 : index
    %c0_1 = arith.constant 0 : index
    %1 = vector.load %arg4[%c32, %c0_1] : memref<352x64xf32, #tpu.memory_space<vmem>>, vector<64x64xf32>
    %c96 = arith.constant 96 : index
    %c0_2 = arith.constant 0 : index
    %2 = vector.load %arg4[%c96, %c0_2] : memref<352x64xf32, #tpu.memory_space<vmem>>, vector<64x64xf32>
    %c160 = arith.constant 160 : index
    %c0_3 = arith.constant 0 : index
    %3 = vector.load %arg4[%c160, %c0_3] : memref<352x64xf32, #tpu.memory_space<vmem>>, vector<64x64xf32>
    %c224 = arith.constant 224 : index
    %c0_4 = arith.constant 0 : index
    %4 = vector.load %arg4[%c224, %c0_4] : memref<352x64xf32, #tpu.memory_space<vmem>>, vector<64x64xf32>
    %c288 = arith.constant 288 : index
    %c0_5 = arith.constant 0 : index
    %5 = vector.load %arg4[%c288, %c0_5] : memref<352x64xf32, #tpu.memory_space<vmem>>, vector<64x64xf32>
    %c0_6 = arith.constant 0 : index
    %c0_7 = arith.constant 0 : index
    %6 = vector.load %arg6[%c0_6, %c0_7] : memref<8x64xf32, #tpu.memory_space<vmem>>, vector<8x64xf32>
    %7 = vector.extract_strided_slice %6 {offsets = [0, 0], sizes = [1, 64], strides = [1, 1]} : vector<8x64xf32> to vector<1x64xf32>
    %8 = vector.extract_strided_slice %6 {offsets = [1, 0], sizes = [1, 64], strides = [1, 1]} : vector<8x64xf32> to vector<1x64xf32>
    %9 = vector.extract_strided_slice %6 {offsets = [2, 0], sizes = [1, 64], strides = [1, 1]} : vector<8x64xf32> to vector<1x64xf32>
    %10 = vector.extract_strided_slice %6 {offsets = [3, 0], sizes = [1, 64], strides = [1, 1]} : vector<8x64xf32> to vector<1x64xf32>
    %11 = vector.extract_strided_slice %6 {offsets = [4, 0], sizes = [1, 5], strides = [1, 1]} : vector<8x64xf32> to vector<1x5xf32>
    %c0_8 = arith.constant 0 : index
    %c0_9 = arith.constant 0 : index
    %c0_10 = arith.constant 0 : index
    %12 = vector.load %arg1[%c0_8, %c0_9, %c0_10] : memref<1x8x32xf32, #tpu.memory_space<vmem>>, vector<1x8x32xf32>
    %13 = vector.shape_cast %12 : vector<1x8x32xf32> to vector<8x32xf32>
    %c0_11 = arith.constant 0 : index
    %c0_12 = arith.constant 0 : index
    %c0_13 = arith.constant 0 : index
    %14 = vector.load %arg2[%c0_11, %c0_12, %c0_13] : memref<1x8x32xf32, #tpu.memory_space<vmem>>, vector<1x8x32xf32>
    %15 = vector.shape_cast %14 : vector<1x8x32xf32> to vector<8x32xf32>
    %c0_14 = arith.constant 0 : index
    %c0_15 = arith.constant 0 : index
    %c0_16 = arith.constant 0 : index
    %16 = vector.load %arg3[%c0_14, %c0_15, %c0_16] : memref<1x8x32xf32, #tpu.memory_space<vmem>>, vector<1x8x32xf32>
    %17 = vector.shape_cast %16 : vector<1x8x32xf32> to vector<8x32xf32>
    %18 = tpu.concatenate %13, %15, %17 in 0 : vector<8x32xf32>, vector<8x32xf32>, vector<8x32xf32> -> vector<24x32xf32>
    %cst = arith.constant dense<0.000000e+00> : vector<24x64xf32>
    %19 = tpu.matmul %18, %0, %cst {dimension_numbers = #tpu.dot_dimension_numbers<[1], [0], [0], [1], [0, 0, 1, 1], [], []>} : vector<24x32xf32>, vector<32x64xf32>, vector<24x64xf32> -> vector<24x64xf32>
    %20 = vector.broadcast %7 : vector<1x64xf32> to vector<24x64xf32>
    %21 = arith.addf %19, %20 : vector<24x64xf32>
    %cst_17 = arith.constant 0.000000e+00 : f32
    %22 = vector.broadcast %cst_17 : f32 to vector<24x64xf32>
    %23 = arith.maximumf %21, %22 : vector<24x64xf32>
    %cst_18 = arith.constant dense<0.000000e+00> : vector<24x64xf32>
    %24 = tpu.matmul %23, %4, %cst_18 {dimension_numbers = #tpu.dot_dimension_numbers<[1], [0], [0], [1], [0, 0, 1, 1], [], []>} : vector<24x64xf32>, vector<64x64xf32>, vector<24x64xf32> -> vector<24x64xf32>
    %25 = vector.broadcast %8 : vector<1x64xf32> to vector<24x64xf32>
    %26 = arith.addf %24, %25 : vector<24x64xf32>
    %cst_19 = arith.constant 0.000000e+00 : f32
    %27 = vector.broadcast %cst_19 : f32 to vector<24x64xf32>
    %28 = arith.maximumf %26, %27 : vector<24x64xf32>
    %29 = vector.extract_strided_slice %28 {offsets = [0, 0], sizes = [8, 64], strides = [1, 1]} : vector<24x64xf32> to vector<8x64xf32>
    %30 = vector.extract_strided_slice %28 {offsets = [8, 0], sizes = [8, 64], strides = [1, 1]} : vector<24x64xf32> to vector<8x64xf32>
    %31 = vector.extract_strided_slice %28 {offsets = [16, 0], sizes = [8, 64], strides = [1, 1]} : vector<24x64xf32> to vector<8x64xf32>
    %cst_20 = arith.constant dense<0.000000e+00> : vector<8x64xf32>
    %32 = tpu.matmul %29, %1, %cst_20 {dimension_numbers = #tpu.dot_dimension_numbers<[1], [0], [0], [1], [0, 0, 1, 1], [], []>} : vector<8x64xf32>, vector<64x64xf32>, vector<8x64xf32> -> vector<8x64xf32>
    %cst_21 = arith.constant dense<0.000000e+00> : vector<8x64xf32>
    %33 = tpu.matmul %30, %2, %cst_21 {dimension_numbers = #tpu.dot_dimension_numbers<[1], [0], [0], [1], [0, 0, 1, 1], [], []>} : vector<8x64xf32>, vector<64x64xf32>, vector<8x64xf32> -> vector<8x64xf32>
    %34 = arith.addf %32, %33 : vector<8x64xf32>
    %cst_22 = arith.constant dense<0.000000e+00> : vector<8x64xf32>
    %35 = tpu.matmul %31, %3, %cst_22 {dimension_numbers = #tpu.dot_dimension_numbers<[1], [0], [0], [1], [0, 0, 1, 1], [], []>} : vector<8x64xf32>, vector<64x64xf32>, vector<8x64xf32> -> vector<8x64xf32>
    %36 = arith.addf %34, %35 : vector<8x64xf32>
    %37 = vector.broadcast %9 : vector<1x64xf32> to vector<8x64xf32>
    %38 = arith.addf %36, %37 : vector<8x64xf32>
    %cst_23 = arith.constant 0.000000e+00 : f32
    %39 = vector.broadcast %cst_23 : f32 to vector<8x64xf32>
    %40 = arith.maximumf %38, %39 : vector<8x64xf32>
    %cst_24 = arith.constant dense<0.000000e+00> : vector<8x64xf32>
    %41 = tpu.matmul %40, %5, %cst_24 {dimension_numbers = #tpu.dot_dimension_numbers<[1], [0], [0], [1], [0, 0, 1, 1], [], []>} : vector<8x64xf32>, vector<64x64xf32>, vector<8x64xf32> -> vector<8x64xf32>
    %42 = vector.broadcast %10 : vector<1x64xf32> to vector<8x64xf32>
    %43 = arith.addf %41, %42 : vector<8x64xf32>
    %cst_25 = arith.constant 0.000000e+00 : f32
    %44 = vector.broadcast %cst_25 : f32 to vector<8x64xf32>
    %45 = arith.maximumf %43, %44 : vector<8x64xf32>
    %c0_26 = arith.constant 0 : index
    %c0_27 = arith.constant 0 : index
    %46 = vector.load %arg5[%c0_26, %c0_27] : memref<64x5xf32, #tpu.memory_space<vmem>>, vector<64x5xf32>
    %cst_28 = arith.constant dense<0.000000e+00> : vector<8x5xf32>
    %47 = tpu.matmul %45, %46, %cst_28 {dimension_numbers = #tpu.dot_dimension_numbers<[1], [0], [0], [1], [0, 0, 1, 1], [], []>} : vector<8x64xf32>, vector<64x5xf32>, vector<8x5xf32> -> vector<8x5xf32>
    %48 = vector.broadcast %11 : vector<1x5xf32> to vector<8x5xf32>
    %49 = arith.addf %47, %48 : vector<8x5xf32>
    %cst_29 = arith.constant 0.000000e+00 : f32
    %50 = vector.broadcast %cst_29 : f32 to vector<8x5xf32>
    %51 = arith.maximumf %49, %50 : vector<8x5xf32>
    %52 = tpu.iota {dimensions = array<i32: 0>} : vector<8x5xi32>
    %c0_i32 = arith.constant 0 : i32
    %53 = vector.broadcast %c0_i32 : i32 to vector<8x5xi32>
    %54 = arith.cmpi sgt, %52, %53 : vector<8x5xi32>
    %cst_30 = arith.constant 0.000000e+00 : f32
    %55 = vector.broadcast %cst_30 : f32 to vector<8x5xf32>
    %56 = arith.select %54, %51, %55 : vector<8x5xi1>, vector<8x5xf32>
    %57 = vector.shape_cast %56 : vector<8x5xf32> to vector<1x8x5xf32>
    %cst_31 = arith.constant dense<0.000000e+00> : vector<1xf32>
    %58 = vector.multi_reduction <add>, %57, %cst_31 [1, 2] : vector<1x8x5xf32> to vector<1xf32>
    %59 = vector.shape_cast %58 : vector<1xf32> to vector<1x1x1xf32>
    %60 = vector.extract %59[0, 0, 0] : f32 from vector<1x1x1xf32>
    %61 = vector.extract_strided_slice %51 {offsets = [0, 0], sizes = [1, 5], strides = [1, 1]} : vector<8x5xf32> to vector<1x5xf32>
    %cst_32 = arith.constant 0.0285714287 : f32
    %62 = arith.mulf %60, %cst_32 : f32
    %63 = vector.broadcast %62 : f32 to vector<1x5xf32>
    %64 = arith.addf %61, %63 : vector<1x5xf32>
    %c0_33 = arith.constant 0 : index
    %c0_34 = arith.constant 0 : index
    %c0_35 = arith.constant 0 : index
    %65 = vector.load %arg7[%c0_33, %c0_34, %c0_35] : memref<1x1x5xf32, #tpu.memory_space<vmem>>, vector<1x1x5xf32>
    %66 = vector.shape_cast %65 : vector<1x1x5xf32> to vector<1x5xf32>
    %67 = vector.shape_cast %64 : vector<1x5xf32> to vector<1x1x5xf32>
    tpu.vector_store %arg7[%c0_33, %c0_34, %c0_35], %67 {strides = array<i32>} : memref<1x1x5xf32, #tpu.memory_space<vmem>>, vector<1x1x5xf32>,
    return
  }
  func.func @transform_0(%arg0: i32) -> (i32, i32, i32) {
    %c0_i32 = arith.constant 0 : i32
    %c0_i32_0 = arith.constant 0 : i32
    %c0_i32_1 = arith.constant 0 : i32
    return %arg0, %c0_i32, %c0_i32_0 : i32, i32, i32
  }
  func.func @transform_1(%arg0: i32) -> (i32, i32, i32) {
    %c0_i32 = arith.constant 0 : i32
    %c0_i32_0 = arith.constant 0 : i32
    %c0_i32_1 = arith.constant 0 : i32
    return %arg0, %c0_i32, %c0_i32_0 : i32, i32, i32
  }
  func.func @transform_2(%arg0: i32) -> (i32, i32, i32) {
    %c0_i32 = arith.constant 0 : i32
    %c0_i32_0 = arith.constant 0 : i32
    %c0_i32_1 = arith.constant 0 : i32
    return %arg0, %c0_i32, %c0_i32_0 : i32, i32, i32
  }
  func.func @transform_3(%arg0: i32) -> (i32, i32) {
    %c0_i32 = arith.constant 0 : i32
    %c0_i32_0 = arith.constant 0 : i32
    %c0_i32_1 = arith.constant 0 : i32
    return %c0_i32, %c0_i32_0 : i32, i32
  }
  func.func @transform_4(%arg0: i32) -> (i32, i32) {
    %c0_i32 = arith.constant 0 : i32
    %c0_i32_0 = arith.constant 0 : i32
    %c0_i32_1 = arith.constant 0 : i32
    return %c0_i32, %c0_i32_0 : i32, i32
  }
  func.func @transform_5(%arg0: i32) -> (i32, i32) {
    %c0_i32 = arith.constant 0 : i32
    %c0_i32_0 = arith.constant 0 : i32
    %c0_i32_1 = arith.constant 0 : i32
    return %c0_i32, %c0_i32_0 : i32, i32
  }
  func.func @transform_6(%arg0: i32) -> (i32, i32, i32) {
    %c0_i32 = arith.constant 0 : i32
    %c0_i32_0 = arith.constant 0 : i32
    %c0_i32_1 = arith.constant 0 : i32
    return %arg0, %c0_i32, %c0_i32_0 : i32, i32, i32
  }
}

</mosaic_0001>

<llo_original>
// kernel: multi_in_forward.1
$region0: #{multi_in_forward.1}
  #allocation0 [shape = 'u32[]', space=smem, size = 0x4, offset = 0x4, fixed_abs, tag = 'smem constant byte address 0x4 - core index']
  #allocation1 [shape = 'u32[144,128]{1,0:T(1,128)}', space=vmem, size = 0x12000, scoped, tag = 'internal scratch']
  %s0 = inlined_call_operand.vmem [shape: f32[1,8,32], index: 0, kind: input, shape index: {}]
  %s1 = inlined_call_operand.vmem [shape: f32[1,8,32], index: 1, kind: input, shape index: {}]
  %s2 = inlined_call_operand.vmem [shape: f32[1,8,32], index: 2, kind: input, shape index: {}]
  %s3 = inlined_call_operand.vmem [shape: f32[352,64], index: 3, kind: input, shape index: {}]
  %s4 = inlined_call_operand.vmem [shape: f32[64,5], index: 4, kind: input, shape index: {}]
  %s5 = inlined_call_operand.vmem [shape: f32[8,64], index: 5, kind: input, shape index: {}]
  %s6 = inlined_call_operand.hbm [shape: f32[1,1,5], index: 6, kind: output, shape index: {}]
  %s7 = sld [smem:[#allocation0]]
  $region34: #{multi_in_forward.1} parent=0
    _
  %s9 = ssub.s32 1, %s7
  %s10 = scalar_select 0, %s9, %s7
  $region1: #{multi_in_forward.1} parent=0
    #allocation2 [shape = 'u8[512]{0}', space=vmem, size = 0x400, scoped, tag = 'output window, operand 0, single buffered']
    #allocation3 [shape = 's32[1]{0}', space=sflag, size = 0x4, scoped, tag = 'scoped memory for multi_in_forward.1']
    %11 = vsyncpa [#allocation3], 0
    // Predicated region
    $region2: #{multi_in_forward.1} parent=1 // pred_check
      _
    $region3: #{multi_in_forward.1} parent=1 // pred_check_branch
      %13 = sbr.rel (0) target = $region5
    $region4: #{multi_in_forward.1} parent=1 // pred_region
      _
    $region5: #{multi_in_forward.1} parent=1 // pred_fallthru
      _
    // Predicated region
    $region6: #{multi_in_forward.1} parent=1 // pred_check
      _
    $region7: #{multi_in_forward.1} parent=1 // pred_check_branch
      %15 = sbr.rel (0) target = $region9
    $region8: #{multi_in_forward.1} parent=1 // pred_region
      _
    $region9: #{multi_in_forward.1} parent=1 // pred_fallthru
      _
    // Predicated region
    $region10: #{multi_in_forward.1} parent=1 // pred_check
      _
    $region11: #{multi_in_forward.1} parent=1 // pred_check_branch
      %17 = sbr.rel (0) target = $region13
    $region12: #{multi_in_forward.1} parent=1 // pred_region
      _
    $region13: #{multi_in_forward.1} parent=1 // pred_fallthru
      _
    // Predicated region
    $region14: #{multi_in_forward.1} parent=1 // pred_check
      _
    $region15: #{multi_in_forward.1} parent=1 // pred_check_branch
      %19 = sbr.rel (0) target = $region17
    $region16: #{multi_in_forward.1} parent=1 // pred_region
      _
    $region17: #{multi_in_forward.1} parent=1 // pred_fallthru
      _
    // Predicated region
    $region18: #{multi_in_forward.1} parent=1 // pred_check
      _
    $region19: #{multi_in_forward.1} parent=1 // pred_check_branch
      %21 = sbr.rel (0) target = $region21
    $region20: #{multi_in_forward.1} parent=1 // pred_region
      _
    $region21: #{multi_in_forward.1} parent=1 // pred_fallthru
      _
    // Predicated region
    $region22: #{multi_in_forward.1} parent=1 // pred_check
      _
    $region23: #{multi_in_forward.1} parent=1 // pred_check_branch
      %23 = sbr.rel (0) target = $region25
    $region24: #{multi_in_forward.1} parent=1 // pred_region
      _
    $region25: #{multi_in_forward.1} parent=1 // pred_fallthru
      _
    %v24 = vld [vmem:[%s3] sm:$0xff]
    %v25 = vld [vmem:[%s3 + $0x8] sm:$0xff]
    %v26 = vld [vmem:[%s3 + $0x10] sm:$0xff]
    %v27 = vld [vmem:[%s3 + $0x18] sm:$0xff]
    %v28 = vld [vmem:[%s3 + $0x20] sm:$0xff]
    %v29 = vld [vmem:[%s3 + $0x28] sm:$0xff]
    %v30 = vld [vmem:[%s3 + $0x30] sm:$0xff]
    %v31 = vld [vmem:[%s3 + $0x38] sm:$0xff]
    %v32 = vld [vmem:[%s3 + $0x40] sm:$0xff]
    %v33 = vld [vmem:[%s3 + $0x48] sm:$0xff]
    %v34 = vld [vmem:[%s3 + $0x50] sm:$0xff]
    %v35 = vld [vmem:[%s3 + $0x58] sm:$0xff]
    %v36 = vld [vmem:[%s3 + $0x60] sm:$0xff]
    %v37 = vld [vmem:[%s3 + $0x68] sm:$0xff]
    %v38 = vld [vmem:[%s3 + $0x70] sm:$0xff]
    %v39 = vld [vmem:[%s3 + $0x78] sm:$0xff]
    %v40 = vld [vmem:[%s3 + $0x80] sm:$0xff]
    %v41 = vld [vmem:[%s3 + $0x88] sm:$0xff]
    %v42 = vld [vmem:[%s3 + $0x90] sm:$0xff]
    %v43 = vld [vmem:[%s3 + $0x98] sm:$0xff]
    %v44 = vld [vmem:[%s3 + $0xa0] sm:$0xff]
    %v45 = vld [vmem:[%s3 + $0xa8] sm:$0xff]
    %v46 = vld [vmem:[%s3 + $0xb0] sm:$0xff]
    %v47 = vld [vmem:[%s3 + $0xb8] sm:$0xff]
    %v48 = vld [vmem:[%s3 + $0xc0] sm:$0xff]
    %v49 = vld [vmem:[%s3 + $0xc8] sm:$0xff]
    %v50 = vld [vmem:[%s3 + $0xd0] sm:$0xff]
    %v51 = vld [vmem:[%s3 + $0xd8] sm:$0xff]
    %v52 = vld [vmem:[%s3 + $0xe0] sm:$0xff]
    %v53 = vld [vmem:[%s3 + $0xe8] sm:$0xff]
    %v54 = vld [vmem:[%s3 + $0xf0] sm:$0xff]
    %v55 = vld [vmem:[%s3 + $0xf8] sm:$0xff]
    %v56 = vld [vmem:[%s3 + $0x100] sm:$0xff]
    %v57 = vld [vmem:[%s3 + $0x108] sm:$0xff]
    %v58 = vld [vmem:[%s3 + $0x110] sm:$0xff]
    %v59 = vld [vmem:[%s3 + $0x118] sm:$0xff]
    %v60 = vld [vmem:[%s3 + $0x120] sm:$0xff]
    %v61 = vld [vmem:[%s3 + $0x128] sm:$0xff]
    %v62 = vld [vmem:[%s3 + $0x130] sm:$0xff]
    %v63 = vld [vmem:[%s3 + $0x138] sm:$0xff]
    %v64 = vld [vmem:[%s3 + $0x140] sm:$0xff]
    %v65 = vld [vmem:[%s3 + $0x148] sm:$0xff]
    %v66 = vld [vmem:[%s3 + $0x150] sm:$0xff]
    %v67 = vld [vmem:[%s3 + $0x158] sm:$0xff]
    %v68 = vld [vmem:[%s5] sm:$0xff]
    %v69 = vld [vmem:[%s0] sm:$0xff]
    %v70 = vld [vmem:[%s1] sm:$0xff]
    %v71 = vld [vmem:[%s2] sm:$0xff]
    %v72 = vlaneseq
    %v73 = vshrl.u32 %v72, 7
    %v74 = vsub.s32 0, %v73
    %v75 = vrot.slane %v68, %v74
    %vm76 = vcmask 261120
    %v78 = vsel %vm76, %v69, 0
    %v81 = vsel %vm76, %v70, 0
    %v84 = vsel %vm76, %v71, 0
    %86 = vmatprep.subr.mxu0 0.0
    %87 = vmatpush1.msra.mxu0 0.0
    %88 = vmatprep.subr.mxu0 0.0
    %89 = vmatpush1.msra.mxu0 0.0
    %90 = vmatprep.subr.mxu0 0.0
    %91 = vmatpush1.msra.mxu0 0.0
    %92 = vmatprep.subr.mxu0 0.0
    %93 = vmatpush1.msra.mxu0 0.0
    %94 = vmatprep.subr.mxu0 0.0
    %95 = vmatpush1.msra.mxu0 0.0
    %96 = vmatprep.subr.mxu0 0.0
    %97 = vmatpush1.msra.mxu0 0.0
    %98 = vmatprep.subr.mxu0 0.0
    %99 = vmatpush1.msra.mxu0 0.0
    %100 = vmatprep.subr.mxu0 0.0
    %101 = vmatpush1.msra.mxu0 0.0
    %102 = vmatprep.subr.mxu0 0.0
    %103 = vmatpush1.msra.mxu0 0.0
    %104 = vmatprep.subr.mxu0 0.0
    %105 = vmatpush1.msra.mxu0 0.0
    %106 = vmatprep.subr.mxu0 0.0
    %107 = vmatpush1.msra.mxu0 0.0
    %108 = vmatprep.subr.mxu0 0.0
    %109 = vmatpush1.msra.mxu0 0.0
    %110 = vmatprep.subr.mxu0 0.0
    %111 = vmatpush1.msra.mxu0 %v27
    %112 = vmatprep.subr.mxu0 0.0
    %113 = vmatpush1.msra.mxu0 %v26
    %114 = vmatprep.subr.mxu0 0.0
    %115 = vmatpush1.msra.mxu0 %v25
    %116 = vmatprep.subr.mxu0 0.0
    %117 = vmatpush1.msra.mxu0 %v24
    %118 = vmatprep.subr.mxu0 0.0
    %119 = vmatpush2.msra.mxu0 0.0
    %120 = vmatprep.subr.mxu0 0.0
    %121 = vmatpush2.msra.mxu0 0.0
    %122 = vmatprep.subr.mxu0 0.0
    %123 = vmatpush2.msra.mxu0 0.0
    %124 = vmatprep.subr.mxu0 0.0
    %125 = vmatpush2.msra.mxu0 0.0
    %126 = vmatprep.subr.mxu0 0.0
    %127 = vmatpush2.msra.mxu0 0.0
    %128 = vmatprep.subr.mxu0 0.0
    %129 = vmatpush2.msra.mxu0 0.0
    %130 = vmatprep.subr.mxu0 0.0
    %131 = vmatpush2.msra.mxu0 0.0
    %132 = vmatprep.subr.mxu0 0.0
    %133 = vmatpush2.msra.mxu0 0.0
    %134 = vmatprep.subr.mxu0 0.0
    %135 = vmatpush2.msra.mxu0 0.0
    %136 = vmatprep.subr.mxu0 0.0
    %137 = vmatpush2.msra.mxu0 0.0
    %138 = vmatprep.subr.mxu0 0.0
    %139 = vmatpush2.msra.mxu0 0.0
    %140 = vmatprep.subr.mxu0 0.0
    %141 = vmatpush2.msra.mxu0 0.0
    %142 = vmatprep.subr.mxu0 0.0
    %143 = vmatpush2.msra.mxu0 0.0
    %144 = vmatprep.subr.mxu0 0.0
    %145 = vmatpush2.msra.mxu0 0.0
    %146 = vmatprep.subr.mxu0 0.0
    %147 = vmatpush2.msra.mxu0 0.0
    %148 = vmatprep.subr.mxu0 0.0
    %149 = vmatpush2.msra.mxu0 0.0
    %150 = vmatprep.mubr.f32.mxu0 0.0
    %151 = vmatmul.mubr.f32.gmra.mxu0 %v78
    %v152 = vpop.f32.mrf.mxu0
    %v153 = vadd.f32 %v75, %v152
    %v154 = vpop.f32.mrf.mxu0
    %155 = vmatprep.mubr.f32.mxu0 0.0
    %156 = vmatmul.mubr.f32.gmra.mxu0 %v81
    %v157 = vpop.f32.mrf.mxu0
    %v158 = vadd.f32 %v75, %v157
    %v159 = vpop.f32.mrf.mxu0
    %160 = vmatprep.mubr.f32.mxu0 0.0
    %161 = vmatmul.mubr.f32.gmra.mxu0 %v84
    %v162 = vpop.f32.mrf.mxu0
    %v163 = vadd.f32 %v75, %v162
    %v164 = vpop.f32.mrf.mxu0
    %165 = vdwg.mxu0
    %v166 = vmax.f32 %v153, 0.0
    %v167 = vmax.f32 %v158, 0.0
    %v168 = vmax.f32 %v163, 0.0
    %v169 = vlaneseq
    %v170 = vshrl.u32 %v169, 7
    %v171 = vsub.s32 1, %v170
    %v172 = vrot.slane %v68, %v171
    %vm173 = vcmask 523264
    %v175 = vsel %vm173, %v166, 0
    %v178 = vsel %vm173, %v167, 0
    %v181 = vsel %vm173, %v168, 0
    %183 = vmatprep.subr.mxu0 0.0
    %184 = vmatpush1.msra.mxu0 0.0
    %185 = vmatprep.subr.mxu0 0.0
    %186 = vmatpush1.msra.mxu0 0.0
    %187 = vmatprep.subr.mxu0 0.0
    %188 = vmatpush1.msra.mxu0 0.0
    %189 = vmatprep.subr.mxu0 0.0
    %190 = vmatpush1.msra.mxu0 0.0
    %191 = vmatprep.subr.mxu0 0.0
    %192 = vmatpush1.msra.mxu0 0.0
    %193 = vmatprep.subr.mxu0 0.0
    %194 = vmatpush1.msra.mxu0 0.0
    %195 = vmatprep.subr.mxu0 0.0
    %196 = vmatpush1.msra.mxu0 0.0
    %197 = vmatprep.subr.mxu0 0.0
    %198 = vmatpush1.msra.mxu0 0.0
    %199 = vmatprep.subr.mxu0 0.0
    %200 = vmatpush1.msra.mxu0 %v59
    %201 = vmatprep.subr.mxu0 0.0
    %202 = vmatpush1.msra.mxu0 %v58
    %203 = vmatprep.subr.mxu0 0.0
    %204 = vmatpush1.msra.mxu0 %v57
    %205 = vmatprep.subr.mxu0 0.0
    %206 = vmatpush1.msra.mxu0 %v56
    %207 = vmatprep.subr.mxu0 0.0
    %208 = vmatpush1.msra.mxu0 %v55
    %209 = vmatprep.subr.mxu0 0.0
    %210 = vmatpush1.msra.mxu0 %v54
    %211 = vmatprep.subr.mxu0 0.0
    %212 = vmatpush1.msra.mxu0 %v53
    %213 = vmatprep.subr.mxu0 0.0
    %214 = vmatpush1.msra.mxu0 %v52
    %215 = vmatprep.subr.mxu0 0.0
    %216 = vmatpush2.msra.mxu0 0.0
    %217 = vmatprep.subr.mxu0 0.0
    %218 = vmatpush2.msra.mxu0 0.0
    %219 = vmatprep.subr.mxu0 0.0
    %220 = vmatpush2.msra.mxu0 0.0
    %221 = vmatprep.subr.mxu0 0.0
    %222 = vmatpush2.msra.mxu0 0.0
    %223 = vmatprep.subr.mxu0 0.0
    %224 = vmatpush2.msra.mxu0 0.0
    %225 = vmatprep.subr.mxu0 0.0
    %226 = vmatpush2.msra.mxu0 0.0
    %227 = vmatprep.subr.mxu0 0.0
    %228 = vmatpush2.msra.mxu0 0.0
    %229 = vmatprep.subr.mxu0 0.0
    %230 = vmatpush2.msra.mxu0 0.0
    %231 = vmatprep.subr.mxu0 0.0
    %232 = vmatpush2.msra.mxu0 0.0
    %233 = vmatprep.subr.mxu0 0.0
    %234 = vmatpush2.msra.mxu0 0.0
    %235 = vmatprep.subr.mxu0 0.0
    %236 = vmatpush2.msra.mxu0 0.0
    %237 = vmatprep.subr.mxu0 0.0
    %238 = vmatpush2.msra.mxu0 0.0
    %239 = vmatprep.subr.mxu0 0.0
    %240 = vmatpush2.msra.mxu0 0.0
    %241 = vmatprep.subr.mxu0 0.0
    %242 = vmatpush2.msra.mxu0 0.0
    %243 = vmatprep.subr.mxu0 0.0
    %244 = vmatpush2.msra.mxu0 0.0
    %245 = vmatprep.subr.mxu0 0.0
    %246 = vmatpush2.msra.mxu0 0.0
    %247 = vmatprep.mubr.f32.mxu0 0.0
    %248 = vmatmul.mubr.f32.gmra.mxu0 %v175
    %v249 = vpop.f32.mrf.mxu0
    %v250 = vadd.f32 %v172, %v249
    %v251 = vpop.f32.mrf.mxu0
    %252 = vmatprep.mubr.f32.mxu0 0.0
    %253 = vmatmul.mubr.f32.gmra.mxu0 %v178
    %v254 = vpop.f32.mrf.mxu0
    %v255 = vadd.f32 %v172, %v254
    %v256 = vpop.f32.mrf.mxu0
    %257 = vmatprep.mubr.f32.mxu0 0.0
    %258 = vmatmul.mubr.f32.gmra.mxu0 %v181
    %v259 = vpop.f32.mrf.mxu0
    %v260 = vadd.f32 %v172, %v259
    %v261 = vpop.f32.mrf.mxu0
    %262 = vdwg.mxu0
    %v263 = vmax.f32 %v250, 0.0
    %v264 = vmax.f32 %v255, 0.0
    %v265 = vmax.f32 %v260, 0.0
    %v267 = vsel %vm173, %v264, 0
    %269 = vmatprep.subr.mxu0 0.0
    %270 = vmatpush1.msra.mxu0 0.0
    %271 = vmatprep.subr.mxu0 0.0
    %272 = vmatpush1.msra.mxu0 0.0
    %273 = vmatprep.subr.mxu0 0.0
    %274 = vmatpush1.msra.mxu0 0.0
    %275 = vmatprep.subr.mxu0 0.0
    %276 = vmatpush1.msra.mxu0 0.0
    %277 = vmatprep.subr.mxu0 0.0
    %278 = vmatpush1.msra.mxu0 0.0
    %279 = vmatprep.subr.mxu0 0.0
    %280 = vmatpush1.msra.mxu0 0.0
    %281 = vmatprep.subr.mxu0 0.0
    %282 = vmatpush1.msra.mxu0 0.0
    %283 = vmatprep.subr.mxu0 0.0
    %284 = vmatpush1.msra.mxu0 0.0
    %285 = vmatprep.subr.mxu0 0.0
    %286 = vmatpush1.msra.mxu0 %v43
    %287 = vmatprep.subr.mxu0 0.0
    %288 = vmatpush1.msra.mxu0 %v42
    %289 = vmatprep.subr.mxu0 0.0
    %290 = vmatpush1.msra.mxu0 %v41
    %291 = vmatprep.subr.mxu0 0.0
    %292 = vmatpush1.msra.mxu0 %v40
    %293 = vmatprep.subr.mxu0 0.0
    %294 = vmatpush1.msra.mxu0 %v39
    %295 = vmatprep.subr.mxu0 0.0
    %296 = vmatpush1.msra.mxu0 %v38
    %297 = vmatprep.subr.mxu0 0.0
    %298 = vmatpush1.msra.mxu0 %v37
    %299 = vmatprep.subr.mxu0 0.0
    %300 = vmatpush1.msra.mxu0 %v36
    %301 = vmatprep.subr.mxu0 0.0
    %302 = vmatpush2.msra.mxu0 0.0
    %303 = vmatprep.subr.mxu0 0.0
    %304 = vmatpush2.msra.mxu0 0.0
    %305 = vmatprep.subr.mxu0 0.0
    %306 = vmatpush2.msra.mxu0 0.0
    %307 = vmatprep.subr.mxu0 0.0
    %308 = vmatpush2.msra.mxu0 0.0
    %309 = vmatprep.subr.mxu0 0.0
    %310 = vmatpush2.msra.mxu0 0.0
    %311 = vmatprep.subr.mxu0 0.0
    %312 = vmatpush2.msra.mxu0 0.0
    %313 = vmatprep.subr.mxu0 0.0
    %314 = vmatpush2.msra.mxu0 0.0
    %315 = vmatprep.subr.mxu0 0.0
    %316 = vmatpush2.msra.mxu0 0.0
    %317 = vmatprep.subr.mxu0 0.0
    %318 = vmatpush2.msra.mxu0 0.0
    %319 = vmatprep.subr.mxu0 0.0
    %320 = vmatpush2.msra.mxu0 0.0
    %321 = vmatprep.subr.mxu0 0.0
    %322 = vmatpush2.msra.mxu0 0.0
    %323 = vmatprep.subr.mxu0 0.0
    %324 = vmatpush2.msra.mxu0 0.0
    %325 = vmatprep.subr.mxu0 0.0
    %326 = vmatpush2.msra.mxu0 0.0
    %327 = vmatprep.subr.mxu0 0.0
    %328 = vmatpush2.msra.mxu0 0.0
    %329 = vmatprep.subr.mxu0 0.0
    %330 = vmatpush2.msra.mxu0 0.0
    %331 = vmatprep.subr.mxu0 0.0
    %332 = vmatpush2.msra.mxu0 0.0
    %333 = vmatprep.mubr.f32.mxu0 0.0
    %334 = vmatmul.mubr.f32.gmra.mxu0 %v267
    %v335 = vpop.f32.mrf.mxu0
    %v336 = vadd.f32 0.0, %v335
    %v337 = vpop.f32.mrf.mxu0
    %338 = vdwg.mxu0
    %v340 = vsel %vm173, %v263, 0
    %342 = vmatprep.subr.mxu0 0.0
    %343 = vmatpush1.msra.mxu0 0.0
    %344 = vmatprep.subr.mxu0 0.0
    %345 = vmatpush1.msra.mxu0 0.0
    %346 = vmatprep.subr.mxu0 0.0
    %347 = vmatpush1.msra.mxu0 0.0
    %348 = vmatprep.subr.mxu0 0.0
    %349 = vmatpush1.msra.mxu0 0.0
    %350 = vmatprep.subr.mxu0 0.0
    %351 = vmatpush1.msra.mxu0 0.0
    %352 = vmatprep.subr.mxu0 0.0
    %353 = vmatpush1.msra.mxu0 0.0
    %354 = vmatprep.subr.mxu0 0.0
    %355 = vmatpush1.msra.mxu0 0.0
    %356 = vmatprep.subr.mxu0 0.0
    %357 = vmatpush1.msra.mxu0 0.0
    %358 = vmatprep.subr.mxu0 0.0
    %359 = vmatpush1.msra.mxu0 %v35
    %360 = vmatprep.subr.mxu0 0.0
    %361 = vmatpush1.msra.mxu0 %v34
    %362 = vmatprep.subr.mxu0 0.0
    %363 = vmatpush1.msra.mxu0 %v33
    %364 = vmatprep.subr.mxu0 0.0
    %365 = vmatpush1.msra.mxu0 %v32
    %366 = vmatprep.subr.mxu0 0.0
    %367 = vmatpush1.msra.mxu0 %v31
    %368 = vmatprep.subr.mxu0 0.0
    %369 = vmatpush1.msra.mxu0 %v30
    %370 = vmatprep.subr.mxu0 0.0
    %371 = vmatpush1.msra.mxu0 %v29
    %372 = vmatprep.subr.mxu0 0.0
    %373 = vmatpush1.msra.mxu0 %v28
    %374 = vmatprep.subr.mxu0 0.0
    %375 = vmatpush2.msra.mxu0 0.0
    %376 = vmatprep.subr.mxu0 0.0
    %377 = vmatpush2.msra.mxu0 0.0
    %378 = vmatprep.subr.mxu0 0.0
    %379 = vmatpush2.msra.mxu0 0.0
    %380 = vmatprep.subr.mxu0 0.0
    %381 = vmatpush2.msra.mxu0 0.0
    %382 = vmatprep.subr.mxu0 0.0
    %383 = vmatpush2.msra.mxu0 0.0
    %384 = vmatprep.subr.mxu0 0.0
    %385 = vmatpush2.msra.mxu0 0.0
    %386 = vmatprep.subr.mxu0 0.0
    %387 = vmatpush2.msra.mxu0 0.0
    %388 = vmatprep.subr.mxu0 0.0
    %389 = vmatpush2.msra.mxu0 0.0
    %390 = vmatprep.subr.mxu0 0.0
    %391 = vmatpush2.msra.mxu0 0.0
    %392 = vmatprep.subr.mxu0 0.0
    %393 = vmatpush2.msra.mxu0 0.0
    %394 = vmatprep.subr.mxu0 0.0
    %395 = vmatpush2.msra.mxu0 0.0
    %396 = vmatprep.subr.mxu0 0.0
    %397 = vmatpush2.msra.mxu0 0.0
    %398 = vmatprep.subr.mxu0 0.0
    %399 = vmatpush2.msra.mxu0 0.0
    %400 = vmatprep.subr.mxu0 0.0
    %401 = vmatpush2.msra.mxu0 0.0
    %402 = vmatprep.subr.mxu0 0.0
    %403 = vmatpush2.msra.mxu0 0.0
    %404 = vmatprep.subr.mxu0 0.0
    %405 = vmatpush2.msra.mxu0 0.0
    %406 = vmatprep.mubr.f32.mxu0 0.0
    %407 = vmatmul.mubr.f32.gmra.mxu0 %v340
    %v408 = vpop.f32.mrf.mxu0
    %v409 = vadd.f32 %v336, %v408
    %v410 = vpop.f32.mrf.mxu0
    %411 = vdwg.mxu0
    %v413 = vsel %vm173, %v265, 0
    %415 = vmatprep.subr.mxu0 0.0
    %416 = vmatpush1.msra.mxu0 0.0
    %417 = vmatprep.subr.mxu0 0.0
    %418 = vmatpush1.msra.mxu0 0.0
    %419 = vmatprep.subr.mxu0 0.0
    %420 = vmatpush1.msra.mxu0 0.0
    %421 = vmatprep.subr.mxu0 0.0
    %422 = vmatpush1.msra.mxu0 0.0
    %423 = vmatprep.subr.mxu0 0.0
    %424 = vmatpush1.msra.mxu0 0.0
    %425 = vmatprep.subr.mxu0 0.0
    %426 = vmatpush1.msra.mxu0 0.0
    %427 = vmatprep.subr.mxu0 0.0
    %428 = vmatpush1.msra.mxu0 0.0
    %429 = vmatprep.subr.mxu0 0.0
    %430 = vmatpush1.msra.mxu0 0.0
    %431 = vmatprep.subr.mxu0 0.0
    %432 = vmatpush1.msra.mxu0 %v51
    %433 = vmatprep.subr.mxu0 0.0
    %434 = vmatpush1.msra.mxu0 %v50
    %435 = vmatprep.subr.mxu0 0.0
    %436 = vmatpush1.msra.mxu0 %v49
    %437 = vmatprep.subr.mxu0 0.0
    %438 = vmatpush1.msra.mxu0 %v48
    %439 = vmatprep.subr.mxu0 0.0
    %440 = vmatpush1.msra.mxu0 %v47
    %441 = vmatprep.subr.mxu0 0.0
    %442 = vmatpush1.msra.mxu0 %v46
    %443 = vmatprep.subr.mxu0 0.0
    %444 = vmatpush1.msra.mxu0 %v45
    %445 = vmatprep.subr.mxu0 0.0
    %446 = vmatpush1.msra.mxu0 %v44
    %447 = vmatprep.subr.mxu0 0.0
    %448 = vmatpush2.msra.mxu0 0.0
    %449 = vmatprep.subr.mxu0 0.0
    %450 = vmatpush2.msra.mxu0 0.0
    %451 = vmatprep.subr.mxu0 0.0
    %452 = vmatpush2.msra.mxu0 0.0
    %453 = vmatprep.subr.mxu0 0.0
    %454 = vmatpush2.msra.mxu0 0.0
    %455 = vmatprep.subr.mxu0 0.0
    %456 = vmatpush2.msra.mxu0 0.0
    %457 = vmatprep.subr.mxu0 0.0
    %458 = vmatpush2.msra.mxu0 0.0
    %459 = vmatprep.subr.mxu0 0.0
    %460 = vmatpush2.msra.mxu0 0.0
    %461 = vmatprep.subr.mxu0 0.0
    %462 = vmatpush2.msra.mxu0 0.0
    %463 = vmatprep.subr.mxu0 0.0
    %464 = vmatpush2.msra.mxu0 0.0
    %465 = vmatprep.subr.mxu0 0.0
    %466 = vmatpush2.msra.mxu0 0.0
    %467 = vmatprep.subr.mxu0 0.0
    %468 = vmatpush2.msra.mxu0 0.0
    %469 = vmatprep.subr.mxu0 0.0
    %470 = vmatpush2.msra.mxu0 0.0
    %471 = vmatprep.subr.mxu0 0.0
    %472 = vmatpush2.msra.mxu0 0.0
    %473 = vmatprep.subr.mxu0 0.0
    %474 = vmatpush2.msra.mxu0 0.0
    %475 = vmatprep.subr.mxu0 0.0
    %476 = vmatpush2.msra.mxu0 0.0
    %477 = vmatprep.subr.mxu0 0.0
    %478 = vmatpush2.msra.mxu0 0.0
    %479 = vmatprep.mubr.f32.mxu0 0.0
    %480 = vmatmul.mubr.f32.gmra.mxu0 %v413
    %v481 = vpop.f32.mrf.mxu0
    %v482 = vadd.f32 0.0, %v481
    %v483 = vpop.f32.mrf.mxu0
    %484 = vdwg.mxu0
    %v485 = vadd.f32 %v409, %v482
    %v486 = vlaneseq
    %v487 = vshrl.u32 %v486, 7
    %v488 = vsub.s32 2, %v487
    %v489 = vrot.slane %v68, %v488
    %v490 = vadd.f32 %v485, %v489
    %v491 = vmax.f32 %v490, 0.0
    %v492 = vlaneseq
    %v493 = vshrl.u32 %v492, 7
    %v494 = vsub.s32 3, %v493
    %v495 = vrot.slane %v68, %v494
    %v497 = vsel %vm173, %v491, 0
    %499 = vmatprep.subr.mxu0 0.0
    %500 = vmatpush1.msra.mxu0 0.0
    %501 = vmatprep.subr.mxu0 0.0
    %502 = vmatpush1.msra.mxu0 0.0
    %503 = vmatprep.subr.mxu0 0.0
    %504 = vmatpush1.msra.mxu0 0.0
    %505 = vmatprep.subr.mxu0 0.0
    %506 = vmatpush1.msra.mxu0 0.0
    %507 = vmatprep.subr.mxu0 0.0
    %508 = vmatpush1.msra.mxu0 0.0
    %509 = vmatprep.subr.mxu0 0.0
    %510 = vmatpush1.msra.mxu0 0.0
    %511 = vmatprep.subr.mxu0 0.0
    %512 = vmatpush1.msra.mxu0 0.0
    %513 = vmatprep.subr.mxu0 0.0
    %514 = vmatpush1.msra.mxu0 0.0
    %515 = vmatprep.subr.mxu0 0.0
    %516 = vmatpush1.msra.mxu0 %v67
    %517 = vmatprep.subr.mxu0 0.0
    %518 = vmatpush1.msra.mxu0 %v66
    %519 = vmatprep.subr.mxu0 0.0
    %520 = vmatpush1.msra.mxu0 %v65
    %521 = vmatprep.subr.mxu0 0.0
    %522 = vmatpush1.msra.mxu0 %v64
    %523 = vmatprep.subr.mxu0 0.0
    %524 = vmatpush1.msra.mxu0 %v63
    %525 = vmatprep.subr.mxu0 0.0
    %526 = vmatpush1.msra.mxu0 %v62
    %527 = vmatprep.subr.mxu0 0.0
    %528 = vmatpush1.msra.mxu0 %v61
    %529 = vmatprep.subr.mxu0 0.0
    %530 = vmatpush1.msra.mxu0 %v60
    %531 = vmatprep.subr.mxu0 0.0
    %532 = vmatpush2.msra.mxu0 0.0
    %533 = vmatprep.subr.mxu0 0.0
    %534 = vmatpush2.msra.mxu0 0.0
    %535 = vmatprep.subr.mxu0 0.0
    %536 = vmatpush2.msra.mxu0 0.0
    %537 = vmatprep.subr.mxu0 0.0
    %538 = vmatpush2.msra.mxu0 0.0
    %539 = vmatprep.subr.mxu0 0.0
    %540 = vmatpush2.msra.mxu0 0.0
    %541 = vmatprep.subr.mxu0 0.0
    %542 = vmatpush2.msra.mxu0 0.0
    %543 = vmatprep.subr.mxu0 0.0
    %544 = vmatpush2.msra.mxu0 0.0
    %545 = vmatprep.subr.mxu0 0.0
    %546 = vmatpush2.msra.mxu0 0.0
    %547 = vmatprep.subr.mxu0 0.0
    %548 = vmatpush2.msra.mxu0 0.0
    %549 = vmatprep.subr.mxu0 0.0
    %550 = vmatpush2.msra.mxu0 0.0
    %551 = vmatprep.subr.mxu0 0.0
    %552 = vmatpush2.msra.mxu0 0.0
    %553 = vmatprep.subr.mxu0 0.0
    %554 = vmatpush2.msra.mxu0 0.0
    %555 = vmatprep.subr.mxu0 0.0
    %556 = vmatpush2.msra.mxu0 0.0
    %557 = vmatprep.subr.mxu0 0.0
    %558 = vmatpush2.msra.mxu0 0.0
    %559 = vmatprep.subr.mxu0 0.0
    %560 = vmatpush2.msra.mxu0 0.0
    %561 = vmatprep.subr.mxu0 0.0
    %562 = vmatpush2.msra.mxu0 0.0
    %563 = vmatprep.mubr.f32.mxu0 0.0
    %564 = vmatmul.mubr.f32.gmra.mxu0 %v497
    %v565 = vpop.f32.mrf.mxu0
    %v566 = vadd.f32 %v495, %v565
    %v567 = vpop.f32.mrf.mxu0
    %568 = vdwg.mxu0
    %v569 = vmax.f32 %v566, 0.0
    %v570 = vld [vmem:[%s4] sm:$0xff]
    %v571 = vld [vmem:[%s4 + $0x8] sm:$0xff]
    %v572 = vld [vmem:[%s4 + $0x10] sm:$0xff]
    %v573 = vld [vmem:[%s4 + $0x18] sm:$0xff]
    %v574 = vld [vmem:[%s4 + $0x20] sm:$0xff]
    %v575 = vld [vmem:[%s4 + $0x28] sm:$0xff]
    %v576 = vld [vmem:[%s4 + $0x30] sm:$0xff]
    %v577 = vld [vmem:[%s4 + $0x38] sm:$0xff]
    %v578 = vlaneseq
    %v579 = vshrl.u32 %v578, 7
    %v580 = vsub.s32 4, %v579
    %v581 = vrot.slane %v68, %v580
    %v583 = vsel %vm173, %v569, 0
    %585 = vmatprep.subr.mxu0 0.0
    %586 = vmatpush1.msra.mxu0 0.0
    %587 = vmatprep.subr.mxu0 0.0
    %588 = vmatpush1.msra.mxu0 0.0
    %589 = vmatprep.subr.mxu0 0.0
    %590 = vmatpush1.msra.mxu0 0.0
    %591 = vmatprep.subr.mxu0 0.0
    %592 = vmatpush1.msra.mxu0 0.0
    %593 = vmatprep.subr.mxu0 0.0
    %594 = vmatpush1.msra.mxu0 0.0
    %595 = vmatprep.subr.mxu0 0.0
    %596 = vmatpush1.msra.mxu0 0.0
    %597 = vmatprep.subr.mxu0 0.0
    %598 = vmatpush1.msra.mxu0 0.0
    %599 = vmatprep.subr.mxu0 0.0
    %600 = vmatpush1.msra.mxu0 0.0
    %601 = vmatprep.subr.mxu0 0.0
    %602 = vmatpush1.msra.mxu0 %v577
    %603 = vmatprep.subr.mxu0 0.0
    %604 = vmatpush1.msra.mxu0 %v576
    %605 = vmatprep.subr.mxu0 0.0
    %606 = vmatpush1.msra.mxu0 %v575
    %607 = vmatprep.subr.mxu0 0.0
    %608 = vmatpush1.msra.mxu0 %v574
    %609 = vmatprep.subr.mxu0 0.0
    %610 = vmatpush1.msra.mxu0 %v573
    %611 = vmatprep.subr.mxu0 0.0
    %612 = vmatpush1.msra.mxu0 %v572
    %613 = vmatprep.subr.mxu0 0.0
    %614 = vmatpush1.msra.mxu0 %v571
    %615 = vmatprep.subr.mxu0 0.0
    %616 = vmatpush1.msra.mxu0 %v570
    %617 = vmatprep.subr.mxu0 0.0
    %618 = vmatpush2.msra.mxu0 0.0
    %619 = vmatprep.subr.mxu0 0.0
    %620 = vmatpush2.msra.mxu0 0.0
    %621 = vmatprep.subr.mxu0 0.0
    %622 = vmatpush2.msra.mxu0 0.0
    %623 = vmatprep.subr.mxu0 0.0
    %624 = vmatpush2.msra.mxu0 0.0
    %625 = vmatprep.subr.mxu0 0.0
    %626 = vmatpush2.msra.mxu0 0.0
    %627 = vmatprep.subr.mxu0 0.0
    %628 = vmatpush2.msra.mxu0 0.0
    %629 = vmatprep.subr.mxu0 0.0
    %630 = vmatpush2.msra.mxu0 0.0
    %631 = vmatprep.subr.mxu0 0.0
    %632 = vmatpush2.msra.mxu0 0.0
    %633 = vmatprep.subr.mxu0 0.0
    %634 = vmatpush2.msra.mxu0 0.0
    %635 = vmatprep.subr.mxu0 0.0
    %636 = vmatpush2.msra.mxu0 0.0
    %637 = vmatprep.subr.mxu0 0.0
    %638 = vmatpush2.msra.mxu0 0.0
    %639 = vmatprep.subr.mxu0 0.0
    %640 = vmatpush2.msra.mxu0 0.0
    %641 = vmatprep.subr.mxu0 0.0
    %642 = vmatpush2.msra.mxu0 0.0
    %643 = vmatprep.subr.mxu0 0.0
    %644 = vmatpush2.msra.mxu0 0.0
    %645 = vmatprep.subr.mxu0 0.0
    %646 = vmatpush2.msra.mxu0 0.0
    %647 = vmatprep.subr.mxu0 0.0
    %648 = vmatpush2.msra.mxu0 0.0
    %649 = vmatprep.mubr.f32.mxu0 0.0
    %650 = vmatmul.mubr.f32.gmra.mxu0 %v583
    %v651 = vpop.f32.mrf.mxu0
    %v652 = vadd.f32 %v581, %v651
    %v653 = vpop.f32.mrf.mxu0
    %654 = vdwg.mxu0
    %v655 = vmax.f32 %v652, 0.0
    %v656 = vlaneseq
    %v657 = vshrl.u32 %v656, 7
    %vm658 = vcmp.gt.s32.totalorder %v657, 0
    %v659 = vsel %vm658, %v655, 0.0
    %vm660 = vcmask 39936
    %v661 = vsel %vm660, %v659, 0.0
    %662 = vadd.xlane.f32.xlu0 %v661
    %v663 = vpop.xlane.xlu0 %662
    %v664 = vrot.slane %v663, 4
    %v665 = vadd.f32 %v663, %v664
    %v666 = vrot.slane %v665, 2
    %v667 = vadd.f32 %v665, %v666
    %v668 = vrot.slane %v667, 1
    %v669 = vadd.f32 %v667, %v668
    %s670 = vtos %v669
    %s671 = smul.f32 %s670, 0.028571429
    %v672 = vstv %s671
    %v673 = vadd.f32 %v655, %v672
    %vm674 = vcmask 32768
    %675 = vst.msk [vmem:[#allocation2] sm:$0x1] %vm674, %v673
    // Predicated region
    $region26: #{multi_in_forward.1} parent=1 // pred_check
      _
    $region27: #{multi_in_forward.1} parent=1 // pred_check_branch
      %677 = sbr.rel (0) target = $region29
    $region28: #{multi_in_forward.1} parent=1 // pred_region
      %s679 = ssub.s32 16, 16
      %680 = vsyncadd [#allocation3], %s679
      %s682 = sshll.u32 [#allocation2], 4
      %s683 = int_to_ptr.vmem [resolvable:$true] %s682
      %685 = dma.vmem_to_hbm [thread:$0]  %s683, 16, %s6, [#allocation3]
    $region29: #{multi_in_forward.1} parent=1 // pred_fallthru
      _
    // Predicated region
    $region30: #{multi_in_forward.1} parent=1 // pred_check
      _
    $region31: #{multi_in_forward.1} parent=1 // pred_check_branch
      %687 = sbr.rel (0) target = $region33
    $region32: #{multi_in_forward.1} parent=1 // pred_region
      %688 = dma.done [#allocation3], 16
    $region33: #{multi_in_forward.1} parent=1 // pred_fallthru
      _
    %689 = vsyncpa [#allocation3], 1

</llo_original>
